<compile_context>
chip_gen: v6e
topology: v6e:2x2x1
jax: 0.10.0
libtpu: 0.0.40
codegen_flags: <defaults>
</compile_context>

<pallas_src>
import jax
import jax.numpy as jnp
from jax import lax
from jax.experimental import pallas as pl
from jax.experimental.pallas import tpu as pltpu

_EPS = 1e-5  # BatchNorm1d default eps


def cnn_decoder_kernel(x_ref, w1_ref, w2_ref, params_ref, out_ref):
    B, Cp, L = x_ref.shape          # Cp = channels zero-padded to a sublane group
    H, CK = w1_ref.shape            # CK = K * Cp
    K = CK // Cp
    KO, _ = w2_ref.shape            # KO = K * O
    O = KO // K
    pad = (K - 1) // 2
    Lp = L + 2 * pad                # per-sequence zero-padded length
    Lc = B * Lp - 2 * pad           # conv output columns over the concatenated lane axis
    f32 = jnp.float32

    # ---- packed per-channel parameters (single DMA) -------------------------
    p = params_ref[...]
    gamma = p[:H, 0:1]              # (H, 1)
    beta = p[:H, 1:2]               # (H, 1)
    b2 = p[:O, 2:3]                 # (O, 1)

    # ---- lay the B zero-padded sequences side by side along lanes -----------
    x = x_ref[...]                                          # (B, Cp, L)
    zx = jnp.zeros((Cp, pad), f32)
    parts = []
    for b in range(B):                                      # static unroll, B small
        parts += [zx, x[b], zx]
    xcat = jnp.concatenate(parts, axis=1)                   # (Cp, B*Lp)

    # ---- Conv1d #1: one im2col matmul, every piece an exact 8-sublane group -
    xcol = jnp.concatenate([xcat[:, k:k + Lc] for k in range(K)], axis=0)  # (K*Cp, Lc)
    h = lax.dot_general(w1_ref[...], xcol, (((1,), (0,)), ((), ())),
                        preferred_element_type=f32)         # (H, Lc)
    # NOTE: conv1 bias intentionally omitted — exact no-op under batch-stat BN.

    # column j is a real (non-boundary) conv output iff (j mod Lp) < L
    col = lax.broadcasted_iota(jnp.int32, (H, Lc), 1)
    valid = (col % Lp) < L
    hm = jnp.where(valid, h, 0.0)

    # ---- BatchNorm1d (training-mode batch stats), sums on the idle MXU ------
    inv_n = 1.0 / float(B * L)
    stacked = jnp.concatenate([hm, hm * hm], axis=0)        # (2H, Lc), aligned stack
    stats = lax.dot_general(stacked, jnp.ones((Lc, 1), f32),
                            (((1,), (0,)), ((), ())),
                            preferred_element_type=f32)     # (2H, 1)
    s1 = stats[:H, :]
    s2 = stats[H:, :]
    mean = s1 * inv_n
    var = jnp.maximum(s2 * inv_n - mean * mean, 0.0)        # biased variance
    scale = gamma * lax.rsqrt(var + _EPS)                   # (H, 1)
    shift = beta - mean * scale
    hn = hm * scale + shift                                 # one mul-add per element

    # ---- ELU (alpha = 1).  exp(min(x,0)) - 1 == expm1 well inside f32 tol
    # (kept as exp-1 for lowering portability; abs error ~1e-7 near 0-). ------
    he = jnp.where(hn > 0, hn, jnp.exp(jnp.minimum(hn, 0.0)) - 1.0)
    he = jnp.where(valid, he, 0.0)                          # re-zero boundary gaps

    # ---- Conv1d #2: accumulate over k (one shifted copy live at a time) -----
    zh = jnp.zeros((H, pad), f32)
    hcat = jnp.concatenate([zh, he, zh], axis=1)            # (H, B*Lp)
    w2 = w2_ref[...]                                        # (K*O, H), k-major rows
    acc = lax.dot_general(w2[0:O, :], hcat[:, 0:Lc],
                          (((1,), (0,)), ((), ())), preferred_element_type=f32)
    for k in range(1, K):                                   # static unroll
        acc = acc + lax.dot_general(w2[k * O:(k + 1) * O, :], hcat[:, k:k + Lc],
                                    (((1,), (0,)), ((), ())),
                                    preferred_element_type=f32)
    out_all = acc + b2                                      # (O, Lc)

    # ---- single lane-dense slab store ---------------------------------------
    out_ref[...] = out_all.astype(out_ref.dtype)


@jax.jit
def cnn_decoder_forward(x, w1, b1, gamma, beta, w2, b2):
    """x: (B, latent_channels, forecast) NCL, exactly as the PyTorch module.
    w1: (H, Cin, K), b1: (H,)  [mathematically dead under batch-stat BN, unused],
    gamma/beta: (H,), w2: (O, H, K), b2: (O,).  Returns (B, O, forecast)."""
    del b1  # exact no-op on the output while BatchNorm uses batch statistics
    B, Cin, L = x.shape
    H, _, K = w1.shape
    O = w2.shape[0]
    assert K % 2 == 1, "same-padding derivation assumes an odd kernel size"
    pad = (K - 1) // 2
    Lp = L + 2 * pad
    Lc = B * Lp - 2 * pad
    Cp = max(8, ((Cin + 7) // 8) * 8)      # channel count padded to a sublane group
    R = max(H, O)

    # ---- hoistable weight/param prep (tiny, constant folded across calls) ---
    # conv1 weights: pad Cin -> Cp, reorder to the kernel's k-major im2col cols.
    w1m = jnp.transpose(jnp.pad(w1, ((0, 0), (0, Cp - Cin), (0, 0))),
                        (0, 2, 1)).reshape(H, K * Cp)        # (H, K*Cp)
    # conv2 weights: (O, H, K) -> (K*O, H), k-major 8-row blocks.
    w2m = jnp.transpose(w2, (2, 0, 1)).reshape(K * O, H)     # (K*O, H)
    # pack remaining per-channel vectors into one array -> one DMA.
    params = jnp.stack([jnp.pad(gamma, (0, R - H)),
                        jnp.pad(beta, (0, R - H)),
                        jnp.pad(b2, (0, R - O))], axis=1)    # (R, 3)

    # ---- activation prep: channel zero-pad only (tiny, fused by XLA) --------
    xp = jnp.pad(x, ((0, 0), (0, Cp - Cin), (0, 0)))         # (B, Cp, L)

    vmem = pl.BlockSpec(memory_space=pltpu.MemorySpace.VMEM)
    out_slab = pl.pallas_call(
        cnn_decoder_kernel,
        out_shape=jax.ShapeDtypeStruct((O, Lc), jnp.float32),
        in_specs=[vmem] * 4,
        out_specs=vmem,
    )(xp, w1m, w2m, params)                                  # (O, Lc)

    # ---- lane-dense slab -> (B, O, L): pure layout plumbing ------------------
    out = jnp.pad(out_slab, ((0, 0), (0, 2 * pad)))          # (O, B*Lp)
    out = out.reshape(O, B, Lp)[:, :, :L]                    # (O, B, L)
    return jnp.transpose(out, (1, 0, 2))                     # (B, O, L)


def ref_forward(x, w1, b1, gamma, beta, w2, b2):
    """Pure-JAX reference matching torch semantics (training-mode BN, with b1)."""
    K = w1.shape[2]
    pad = (K - 1) // 2
    dn = ('NCH', 'OIH', 'NCH')
    hp = lax.Precision.HIGHEST
    h = lax.conv_general_dilated(x, w1, (1,), [(pad, pad)], dimension_numbers=dn,
                                 precision=hp) + b1[None, :, None]
    mean = h.mean(axis=(0, 2), keepdims=True)
    var = jnp.square(h - mean).mean(axis=(0, 2), keepdims=True)
    hn = (h - mean) * lax.rsqrt(var + _EPS) * gamma[None, :, None] \
         + beta[None, :, None]
    he = jnp.where(hn > 0, hn, jnp.expm1(jnp.minimum(hn, 0.0)))
    out = lax.conv_general_dilated(he, w2, (1,), [(pad, pad)], dimension_numbers=dn,
                                   precision=hp) + b2[None, :, None]
    return out


if __name__ == "__main__":
    B = 2
    latent_channels = 3
    forecast = 9          # kernel_size == forecast in the module
    hidden_dim = 32
    observable_dim = 8

    key = jax.random.PRNGKey(0)
    ks = jax.random.split(key, 7)
    x = jax.random.normal(ks[0], (B, latent_channels, forecast), jnp.float32)
    w1 = 0.1 * jax.random.normal(ks[1], (hidden_dim, latent_channels, forecast), jnp.float32)
    b1 = 0.1 * jax.random.normal(ks[2], (hidden_dim,), jnp.float32)
    gamma = 1.0 + 0.1 * jax.random.normal(ks[3], (hidden_dim,), jnp.float32)
    beta = 0.1 * jax.random.normal(ks[4], (hidden_dim,), jnp.float32)
    w2 = 0.1 * jax.random.normal(ks[5], (observable_dim, hidden_dim, forecast), jnp.float32)
    b2 = 0.1 * jax.random.normal(ks[6], (observable_dim,), jnp.float32)

    out = cnn_decoder_forward(x, w1, b1, gamma, beta, w2, b2)
    jax.block_until_ready(out)

    ref = ref_forward(x, w1, b1, gamma, beta, w2, b2)
    assert out.shape == (B, observable_dim, forecast), out.shape
    assert jnp.allclose(out, ref, rtol=1e-4, atol=5e-4), "kernel != reference"
    print("KERNEL_OK")
</pallas_src>

<mosaic_0001>
module attributes {stable_mosaic.version = 11 : i64} {
  func.func @cnn_decoder_kernel(%arg0: memref<2x8x9xf32, #tpu.memory_space<vmem>>, %arg1: memref<32x72xf32, #tpu.memory_space<vmem>>, %arg2: memref<72x32xf32, #tpu.memory_space<vmem>>, %arg3: memref<32x3xf32, #tpu.memory_space<vmem>>, %arg4: memref<8x26xf32, #tpu.memory_space<vmem>>) attributes {dimension_semantics = [], scalar_prefetch = 0 : i64, scratch_operands = 0 : i64, tpu.core_type = #tpu.core_type<tc>} {
    %c0 = arith.constant 0 : index
    %c0_0 = arith.constant 0 : index
    %0 = vector.load %arg3[%c0, %c0_0] : memref<32x3xf32, #tpu.memory_space<vmem>>, vector<32x3xf32>
    %1 = vector.extract_strided_slice %0 {offsets = [0, 0], sizes = [32, 1], strides = [1, 1]} : vector<32x3xf32> to vector<32x1xf32>
    %2 = vector.extract_strided_slice %0 {offsets = [0, 1], sizes = [32, 1], strides = [1, 1]} : vector<32x3xf32> to vector<32x1xf32>
    %3 = vector.extract_strided_slice %0 {offsets = [0, 2], sizes = [8, 1], strides = [1, 1]} : vector<32x3xf32> to vector<8x1xf32>
    %c0_1 = arith.constant 0 : index
    %c0_2 = arith.constant 0 : index
    %c0_3 = arith.constant 0 : index
    %4 = vector.load %arg0[%c0_1, %c0_2, %c0_3] : memref<2x8x9xf32, #tpu.memory_space<vmem>>, vector<2x8x9xf32>
    %cst = arith.constant 0.000000e+00 : f32
    %5 = vector.broadcast %cst : f32 to vector<8x4xf32>
    %6 = vector.extract_strided_slice %4 {offsets = [0, 0, 0], sizes = [1, 8, 9], strides = [1, 1, 1]} : vector<2x8x9xf32> to vector<1x8x9xf32>
    %7 = vector.shape_cast %6 : vector<1x8x9xf32> to vector<8x9xf32>
    %8 = vector.extract_strided_slice %4 {offsets = [1, 0, 0], sizes = [1, 8, 9], strides = [1, 1, 1]} : vector<2x8x9xf32> to vector<1x8x9xf32>
    %9 = vector.shape_cast %8 : vector<1x8x9xf32> to vector<8x9xf32>
    %10 = tpu.concatenate %5, %7, %5, %5, %9, %5 in 1 : vector<8x4xf32>, vector<8x9xf32>, vector<8x4xf32>, vector<8x4xf32>, vector<8x9xf32>, vector<8x4xf32> -> vector<8x34xf32>
    %11 = vector.extract_strided_slice %10 {offsets = [0, 0], sizes = [8, 26], strides = [1, 1]} : vector<8x34xf32> to vector<8x26xf32>
    %12 = vector.extract_strided_slice %10 {offsets = [0, 1], sizes = [8, 26], strides = [1, 1]} : vector<8x34xf32> to vector<8x26xf32>
    %13 = vector.extract_strided_slice %10 {offsets = [0, 2], sizes = [8, 26], strides = [1, 1]} : vector<8x34xf32> to vector<8x26xf32>
    %14 = vector.extract_strided_slice %10 {offsets = [0, 3], sizes = [8, 26], strides = [1, 1]} : vector<8x34xf32> to vector<8x26xf32>
    %15 = vector.extract_strided_slice %10 {offsets = [0, 4], sizes = [8, 26], strides = [1, 1]} : vector<8x34xf32> to vector<8x26xf32>
    %16 = vector.extract_strided_slice %10 {offsets = [0, 5], sizes = [8, 26], strides = [1, 1]} : vector<8x34xf32> to vector<8x26xf32>
    %17 = vector.extract_strided_slice %10 {offsets = [0, 6], sizes = [8, 26], strides = [1, 1]} : vector<8x34xf32> to vector<8x26xf32>
    %18 = vector.extract_strided_slice %10 {offsets = [0, 7], sizes = [8, 26], strides = [1, 1]} : vector<8x34xf32> to vector<8x26xf32>
    %19 = vector.extract_strided_slice %10 {offsets = [0, 8], sizes = [8, 26], strides = [1, 1]} : vector<8x34xf32> to vector<8x26xf32>
    %20 = tpu.concatenate %11, %12, %13, %14, %15, %16, %17, %18, %19 in 0 : vector<8x26xf32>, vector<8x26xf32>, vector<8x26xf32>, vector<8x26xf32>, vector<8x26xf32>, vector<8x26xf32>, vector<8x26xf32>, vector<8x26xf32>, vector<8x26xf32> -> vector<72x26xf32>
    %c0_4 = arith.constant 0 : index
    %c0_5 = arith.constant 0 : index
    %21 = vector.load %arg1[%c0_4, %c0_5] : memref<32x72xf32, #tpu.memory_space<vmem>>, vector<32x72xf32>
    %cst_6 = arith.constant dense<0.000000e+00> : vector<32x26xf32>
    %22 = tpu.matmul %21, %20, %cst_6 {dimension_numbers = #tpu.dot_dimension_numbers<[1], [0], [0], [1], [0, 0, 1, 1], [], []>} : vector<32x72xf32>, vector<72x26xf32>, vector<32x26xf32> -> vector<32x26xf32>
    %23 = tpu.iota {dimensions = array<i32: 1>} : vector<32x26xi32>
    %c17_i32 = arith.constant 17 : i32
    %c0_i32 = arith.constant 0 : i32
    %24 = arith.cmpi eq, %c17_i32, %c0_i32 : i32
    %c1_i32 = arith.constant 1 : i32
    %25 = arith.select %24, %c1_i32, %c17_i32 : i32
    %26 = vector.broadcast %25 : i32 to vector<32x26xi32>
    %27 = arith.remsi %23, %26 : vector<32x26xi32>
    %c0_i32_7 = arith.constant 0 : i32
    %28 = vector.broadcast %c0_i32_7 : i32 to vector<32x26xi32>
    %29 = arith.cmpi ne, %27, %28 : vector<32x26xi32>
    %c0_i32_8 = arith.constant 0 : i32
    %30 = vector.broadcast %c0_i32_8 : i32 to vector<32x26xi32>
    %31 = arith.cmpi slt, %27, %30 : vector<32x26xi32>
    %c0_i32_9 = arith.constant 0 : i32
    %32 = arith.cmpi slt, %25, %c0_i32_9 : i32
    %33 = vector.broadcast %32 : i1 to vector<32x26xi1>
    %34 = vector.broadcast %33 : vector<32x26xi1> to vector<32x26xi1>
    %35 = arith.xori %31, %34 : vector<32x26xi1>
    %36 = arith.andi %35, %29 : vector<32x26xi1>
    %37 = vector.broadcast %25 : i32 to vector<32x26xi32>
    %38 = arith.addi %27, %37 : vector<32x26xi32>
    %39 = arith.select %36, %38, %27 : vector<32x26xi1>, vector<32x26xi32>
    %c9_i32 = arith.constant 9 : i32
    %40 = vector.broadcast %c9_i32 : i32 to vector<32x26xi32>
    %41 = arith.cmpi slt, %39, %40 : vector<32x26xi32>
    %cst_10 = arith.constant 0.000000e+00 : f32
    %42 = vector.broadcast %cst_10 : f32 to vector<32x26xf32>
    %43 = arith.select %41, %22, %42 : vector<32x26xi1>, vector<32x26xf32>
    %44 = arith.mulf %43, %43 : vector<32x26xf32>
    %45 = tpu.concatenate %43, %44 in 0 : vector<32x26xf32>, vector<32x26xf32> -> vector<64x26xf32>
    %cst_11 = arith.constant 1.000000e+00 : f32
    %46 = vector.broadcast %cst_11 : f32 to vector<26x1xf32>
    %cst_12 = arith.constant dense<0.000000e+00> : vector<64x1xf32>
    %47 = tpu.matmul %45, %46, %cst_12 {dimension_numbers = #tpu.dot_dimension_numbers<[1], [0], [0], [1], [0, 0, 1, 1], [], []>} : vector<64x26xf32>, vector<26x1xf32>, vector<64x1xf32> -> vector<64x1xf32>
    %48 = vector.extract_strided_slice %47 {offsets = [0, 0], sizes = [32, 1], strides = [1, 1]} : vector<64x1xf32> to vector<32x1xf32>
    %49 = vector.extract_strided_slice %47 {offsets = [32, 0], sizes = [32, 1], strides = [1, 1]} : vector<64x1xf32> to vector<32x1xf32>
    %cst_13 = arith.constant 0.055555556 : f32
    %50 = vector.broadcast %cst_13 : f32 to vector<32x1xf32>
    %51 = arith.mulf %48, %50 : vector<32x1xf32>
    %cst_14 = arith.constant 0.055555556 : f32
    %52 = vector.broadcast %cst_14 : f32 to vector<32x1xf32>
    %53 = arith.mulf %49, %52 : vector<32x1xf32>
    %54 = arith.mulf %51, %51 : vector<32x1xf32>
    %55 = arith.subf %53, %54 : vector<32x1xf32>
    %cst_15 = arith.constant 0.000000e+00 : f32
    %56 = vector.broadcast %cst_15 : f32 to vector<32x1xf32>
    %57 = arith.maximumf %55, %56 : vector<32x1xf32>
    %cst_16 = arith.constant 9.99999974E-6 : f32
    %58 = vector.broadcast %cst_16 : f32 to vector<32x1xf32>
    %59 = arith.addf %57, %58 : vector<32x1xf32>
    %60 = math.rsqrt %59 : vector<32x1xf32>
    %61 = arith.mulf %1, %60 : vector<32x1xf32>
    %62 = arith.mulf %51, %61 : vector<32x1xf32>
    %63 = arith.subf %2, %62 : vector<32x1xf32>
    %64 = vector.broadcast %61 : vector<32x1xf32> to vector<32x26xf32>
    %65 = arith.mulf %43, %64 : vector<32x26xf32>
    %66 = vector.broadcast %63 : vector<32x1xf32> to vector<32x26xf32>
    %67 = arith.addf %65, %66 : vector<32x26xf32>
    %cst_17 = arith.constant 0.000000e+00 : f32
    %68 = vector.broadcast %cst_17 : f32 to vector<32x26xf32>
    %69 = arith.cmpf ogt, %67, %68 : vector<32x26xf32>
    %cst_18 = arith.constant 0.000000e+00 : f32
    %70 = vector.broadcast %cst_18 : f32 to vector<32x26xf32>
    %71 = arith.minimumf %67, %70 : vector<32x26xf32>
    %72 = math.exp %71 : vector<32x26xf32>
    %cst_19 = arith.constant 1.000000e+00 : f32
    %73 = vector.broadcast %cst_19 : f32 to vector<32x26xf32>
    %74 = arith.subf %72, %73 : vector<32x26xf32>
    %75 = arith.select %69, %67, %74 : vector<32x26xi1>, vector<32x26xf32>
    %cst_20 = arith.constant 0.000000e+00 : f32
    %76 = vector.broadcast %cst_20 : f32 to vector<32x26xf32>
    %77 = arith.select %41, %75, %76 : vector<32x26xi1>, vector<32x26xf32>
    %cst_21 = arith.constant 0.000000e+00 : f32
    %78 = vector.broadcast %cst_21 : f32 to vector<32x4xf32>
    %79 = tpu.concatenate %78, %77, %78 in 1 : vector<32x4xf32>, vector<32x26xf32>, vector<32x4xf32> -> vector<32x34xf32>
    %c0_22 = arith.constant 0 : index
    %c0_23 = arith.constant 0 : index
    %80 = vector.load %arg2[%c0_22, %c0_23] : memref<72x32xf32, #tpu.memory_space<vmem>>, vector<72x32xf32>
    %81 = vector.extract_strided_slice %80 {offsets = [0, 0], sizes = [8, 32], strides = [1, 1]} : vector<72x32xf32> to vector<8x32xf32>
    %82 = vector.extract_strided_slice %79 {offsets = [0, 0], sizes = [32, 26], strides = [1, 1]} : vector<32x34xf32> to vector<32x26xf32>
    %cst_24 = arith.constant dense<0.000000e+00> : vector<8x26xf32>
    %83 = tpu.matmul %81, %82, %cst_24 {dimension_numbers = #tpu.dot_dimension_numbers<[1], [0], [0], [1], [0, 0, 1, 1], [], []>} : vector<8x32xf32>, vector<32x26xf32>, vector<8x26xf32> -> vector<8x26xf32>
    %84 = vector.extract_strided_slice %80 {offsets = [8, 0], sizes = [8, 32], strides = [1, 1]} : vector<72x32xf32> to vector<8x32xf32>
    %85 = vector.extract_strided_slice %79 {offsets = [0, 1], sizes = [32, 26], strides = [1, 1]} : vector<32x34xf32> to vector<32x26xf32>
    %cst_25 = arith.constant dense<0.000000e+00> : vector<8x26xf32>
    %86 = tpu.matmul %84, %85, %cst_25 {dimension_numbers = #tpu.dot_dimension_numbers<[1], [0], [0], [1], [0, 0, 1, 1], [], []>} : vector<8x32xf32>, vector<32x26xf32>, vector<8x26xf32> -> vector<8x26xf32>
    %87 = arith.addf %83, %86 : vector<8x26xf32>
    %88 = vector.extract_strided_slice %80 {offsets = [16, 0], sizes = [8, 32], strides = [1, 1]} : vector<72x32xf32> to vector<8x32xf32>
    %89 = vector.extract_strided_slice %79 {offsets = [0, 2], sizes = [32, 26], strides = [1, 1]} : vector<32x34xf32> to vector<32x26xf32>
    %cst_26 = arith.constant dense<0.000000e+00> : vector<8x26xf32>
    %90 = tpu.matmul %88, %89, %cst_26 {dimension_numbers = #tpu.dot_dimension_numbers<[1], [0], [0], [1], [0, 0, 1, 1], [], []>} : vector<8x32xf32>, vector<32x26xf32>, vector<8x26xf32> -> vector<8x26xf32>
    %91 = arith.addf %87, %90 : vector<8x26xf32>
    %92 = vector.extract_strided_slice %80 {offsets = [24, 0], sizes = [8, 32], strides = [1, 1]} : vector<72x32xf32> to vector<8x32xf32>
    %93 = vector.extract_strided_slice %79 {offsets = [0, 3], sizes = [32, 26], strides = [1, 1]} : vector<32x34xf32> to vector<32x26xf32>
    %cst_27 = arith.constant dense<0.000000e+00> : vector<8x26xf32>
    %94 = tpu.matmul %92, %93, %cst_27 {dimension_numbers = #tpu.dot_dimension_numbers<[1], [0], [0], [1], [0, 0, 1, 1], [], []>} : vector<8x32xf32>, vector<32x26xf32>, vector<8x26xf32> -> vector<8x26xf32>
    %95 = arith.addf %91, %94 : vector<8x26xf32>
    %96 = vector.extract_strided_slice %80 {offsets = [32, 0], sizes = [8, 32], strides = [1, 1]} : vector<72x32xf32> to vector<8x32xf32>
    %97 = vector.extract_strided_slice %79 {offsets = [0, 4], sizes = [32, 26], strides = [1, 1]} : vector<32x34xf32> to vector<32x26xf32>
    %cst_28 = arith.constant dense<0.000000e+00> : vector<8x26xf32>
    %98 = tpu.matmul %96, %97, %cst_28 {dimension_numbers = #tpu.dot_dimension_numbers<[1], [0], [0], [1], [0, 0, 1, 1], [], []>} : vector<8x32xf32>, vector<32x26xf32>, vector<8x26xf32> -> vector<8x26xf32>
    %99 = arith.addf %95, %98 : vector<8x26xf32>
    %100 = vector.extract_strided_slice %80 {offsets = [40, 0], sizes = [8, 32], strides = [1, 1]} : vector<72x32xf32> to vector<8x32xf32>
    %101 = vector.extract_strided_slice %79 {offsets = [0, 5], sizes = [32, 26], strides = [1, 1]} : vector<32x34xf32> to vector<32x26xf32>
    %cst_29 = arith.constant dense<0.000000e+00> : vector<8x26xf32>
    %102 = tpu.matmul %100, %101, %cst_29 {dimension_numbers = #tpu.dot_dimension_numbers<[1], [0], [0], [1], [0, 0, 1, 1], [], []>} : vector<8x32xf32>, vector<32x26xf32>, vector<8x26xf32> -> vector<8x26xf32>
    %103 = arith.addf %99, %102 : vector<8x26xf32>
    %104 = vector.extract_strided_slice %80 {offsets = [48, 0], sizes = [8, 32], strides = [1, 1]} : vector<72x32xf32> to vector<8x32xf32>
    %105 = vector.extract_strided_slice %79 {offsets = [0, 6], sizes = [32, 26], strides = [1, 1]} : vector<32x34xf32> to vector<32x26xf32>
    %cst_30 = arith.constant dense<0.000000e+00> : vector<8x26xf32>
    %106 = tpu.matmul %104, %105, %cst_30 {dimension_numbers = #tpu.dot_dimension_numbers<[1], [0], [0], [1], [0, 0, 1, 1], [], []>} : vector<8x32xf32>, vector<32x26xf32>, vector<8x26xf32> -> vector<8x26xf32>
    %107 = arith.addf %103, %106 : vector<8x26xf32>
    %108 = vector.extract_strided_slice %80 {offsets = [56, 0], sizes = [8, 32], strides = [1, 1]} : vector<72x32xf32> to vector<8x32xf32>
    %109 = vector.extract_strided_slice %79 {offsets = [0, 7], sizes = [32, 26], strides = [1, 1]} : vector<32x34xf32> to vector<32x26xf32>
    %cst_31 = arith.constant dense<0.000000e+00> : vector<8x26xf32>
    %110 = tpu.matmul %108, %109, %cst_31 {dimension_numbers = #tpu.dot_dimension_numbers<[1], [0], [0], [1], [0, 0, 1, 1], [], []>} : vector<8x32xf32>, vector<32x26xf32>, vector<8x26xf32> -> vector<8x26xf32>
    %111 = arith.addf %107, %110 : vector<8x26xf32>
    %112 = vector.extract_strided_slice %80 {offsets = [64, 0], sizes = [8, 32], strides = [1, 1]} : vector<72x32xf32> to vector<8x32xf32>
    %113 = vector.extract_strided_slice %79 {offsets = [0, 8], sizes = [32, 26], strides = [1, 1]} : vector<32x34xf32> to vector<32x26xf32>
    %cst_32 = arith.constant dense<0.000000e+00> : vector<8x26xf32>
    %114 = tpu.matmul %112, %113, %cst_32 {dimension_numbers = #tpu.dot_dimension_numbers<[1], [0], [0], [1], [0, 0, 1, 1], [], []>} : vector<8x32xf32>, vector<32x26xf32>, vector<8x26xf32> -> vector<8x26xf32>
    %115 = arith.addf %111, %114 : vector<8x26xf32>
    %116 = vector.broadcast %3 : vector<8x1xf32> to vector<8x26xf32>
    %117 = arith.addf %115, %116 : vector<8x26xf32>
    %c0_33 = arith.constant 0 : index
    %c0_34 = arith.constant 0 : index
    %118 = vector.load %arg4[%c0_33, %c0_34] : memref<8x26xf32, #tpu.memory_space<vmem>>, vector<8x26xf32>
    tpu.vector_store %arg4[%c0_33, %c0_34], %117 {strides = array<i32>} : memref<8x26xf32, #tpu.memory_space<vmem>>, vector<8x26xf32>,
    return
  }
}

</mosaic_0001>

<llo_original>
// kernel: cnn_decoder_forward.1
$region0: #{cnn_decoder_forward.1}
  #allocation0 [shape = 'u32[]', space=smem, size = 0x4, offset = 0x4, fixed_abs, tag = 'smem constant byte address 0x4 - core index']
  #allocation1 [shape = 'u32[144,128]{1,0:T(1,128)}', space=vmem, size = 0x12000, scoped, tag = 'internal scratch']
  %s0 = inlined_call_operand.vmem [shape: f32[2,8,9], index: 0, kind: input, shape index: {}]
  %s1 = inlined_call_operand.vmem [shape: f32[32,72], index: 1, kind: input, shape index: {}]
  %s2 = inlined_call_operand.vmem [shape: f32[72,32], index: 2, kind: input, shape index: {}]
  %s3 = inlined_call_operand.vmem [shape: f32[32,3], index: 3, kind: input, shape index: {}]
  %s4 = inlined_call_operand.vmem [shape: f32[8,26], index: 4, kind: output, shape index: {}]
  %s5 = sld [smem:[#allocation0]]
  $region26: #{cnn_decoder_forward.1} parent=0
    _
  %s7 = ssub.s32 1, %s5
  %s8 = scalar_select 0, %s7, %s5
  // Predicated region
  $region2: #{cnn_decoder_forward.1} parent=0 // pred_check
    _
  $region3: #{cnn_decoder_forward.1} parent=0 // pred_check_branch
    %10 = sbr.rel (0) target = $region5
  $region4: #{cnn_decoder_forward.1} parent=0 // pred_region
    _
  $region5: #{cnn_decoder_forward.1} parent=0 // pred_fallthru
    _
  // Predicated region
  $region6: #{cnn_decoder_forward.1} parent=0 // pred_check
    _
  $region7: #{cnn_decoder_forward.1} parent=0 // pred_check_branch
    %12 = sbr.rel (0) target = $region9
  $region8: #{cnn_decoder_forward.1} parent=0 // pred_region
    _
  $region9: #{cnn_decoder_forward.1} parent=0 // pred_fallthru
    _
  // Predicated region
  $region10: #{cnn_decoder_forward.1} parent=0 // pred_check
    _
  $region11: #{cnn_decoder_forward.1} parent=0 // pred_check_branch
    %14 = sbr.rel (0) target = $region13
  $region12: #{cnn_decoder_forward.1} parent=0 // pred_region
    _
  $region13: #{cnn_decoder_forward.1} parent=0 // pred_fallthru
    _
  // Predicated region
  $region14: #{cnn_decoder_forward.1} parent=0 // pred_check
    _
  $region15: #{cnn_decoder_forward.1} parent=0 // pred_check_branch
    %16 = sbr.rel (0) target = $region17
  $region16: #{cnn_decoder_forward.1} parent=0 // pred_region
    _
  $region17: #{cnn_decoder_forward.1} parent=0 // pred_fallthru
    _
  %v17 = vld [vmem:[%s3] sm:$0xff]
  %v18 = vld [vmem:[%s3 + $0x8] sm:$0xff]
  %v19 = vld [vmem:[%s3 + $0x10] sm:$0xff]
  %v20 = vld [vmem:[%s3 + $0x18] sm:$0xff]
  %v21 = vld [vmem:[%s0] sm:$0xff]
  %v22 = vld [vmem:[%s0 + $0x8] sm:$0xff]
  %24 = vrot.lane.b32.xlu0 %v21, 4
  %v25 = vpop.permute.xlu0 %24
  %28 = vrot.lane.b32.xlu0 %v22, 21
  %v29 = vpop.permute.xlu0 %28
  %vm31 = vcmask 31744
  %v32 = vsel %vm31, 0.0, %v25
  %vm33 = vcmask 105472
  %v34 = vsel %vm33, %v32, 0.0
  %vm35 = vcmask 138240
  %v36 = vsel %vm35, %v34, 0.0
  %vm37 = vcmask 171008
  %v38 = vsel %vm37, %v36, %v29
  %vm39 = vcmask 244736
  %v40 = vsel %vm39, %v38, 0.0
  %42 = vrot.lane.b32.xlu0 %v40, 127
  %v43 = vpop.permute.xlu0 %42
  %45 = vrot.lane.b32.xlu0 %v40, 126
  %v46 = vpop.permute.xlu0 %45
  %48 = vrot.lane.b32.xlu0 %v40, 125
  %v49 = vpop.permute.xlu0 %48
  %51 = vrot.lane.b32.xlu0 %v40, 124
  %v52 = vpop.permute.xlu0 %51
  %54 = vrot.lane.b32.xlu0 %v40, 123
  %v55 = vpop.permute.xlu0 %54
  %57 = vrot.lane.b32.xlu0 %v40, 122
  %v58 = vpop.permute.xlu0 %57
  %60 = vrot.lane.b32.xlu0 %v40, 121
  %v61 = vpop.permute.xlu0 %60
  %63 = vrot.lane.b32.xlu0 %v40, 120
  %v64 = vpop.permute.xlu0 %63
  %v66 = vld [vmem:[%s1] sm:$0xff]
  %v67 = vld [vmem:[%s1 + $0x8] sm:$0xff]
  %v68 = vld [vmem:[%s1 + $0x10] sm:$0xff]
  %v69 = vld [vmem:[%s1 + $0x18] sm:$0xff]
  %vm70 = vcmask 588800
  %v72 = vsel %vm70, %v66, 0
  %v75 = vsel %vm70, %v67, 0
  %v78 = vsel %vm70, %v68, 0
  %v81 = vsel %vm70, %v69, 0
  %83 = vmatprep.subr.mxu0 0.0
  %84 = vmatpush1.msra.mxu0 0.0
  %85 = vmatprep.subr.mxu0 0.0
  %86 = vmatpush1.msra.mxu0 0.0
  %87 = vmatprep.subr.mxu0 0.0
  %88 = vmatpush1.msra.mxu0 0.0
  %89 = vmatprep.subr.mxu0 0.0
  %90 = vmatpush1.msra.mxu0 0.0
  %91 = vmatprep.subr.mxu0 0.0
  %92 = vmatpush1.msra.mxu0 0.0
  %93 = vmatprep.subr.mxu0 0.0
  %94 = vmatpush1.msra.mxu0 0.0
  %95 = vmatprep.subr.mxu0 0.0
  %96 = vmatpush1.msra.mxu0 0.0
  %97 = vmatprep.subr.mxu0 0.0
  %98 = vmatpush1.msra.mxu0 %v64
  %99 = vmatprep.subr.mxu0 0.0
  %100 = vmatpush1.msra.mxu0 %v61
  %101 = vmatprep.subr.mxu0 0.0
  %102 = vmatpush1.msra.mxu0 %v58
  %103 = vmatprep.subr.mxu0 0.0
  %104 = vmatpush1.msra.mxu0 %v55
  %105 = vmatprep.subr.mxu0 0.0
  %106 = vmatpush1.msra.mxu0 %v52
  %107 = vmatprep.subr.mxu0 0.0
  %108 = vmatpush1.msra.mxu0 %v49
  %109 = vmatprep.subr.mxu0 0.0
  %110 = vmatpush1.msra.mxu0 %v46
  %111 = vmatprep.subr.mxu0 0.0
  %112 = vmatpush1.msra.mxu0 %v43
  %113 = vmatprep.subr.mxu0 0.0
  %114 = vmatpush1.msra.mxu0 %v40
  %115 = vmatprep.subr.mxu0 0.0
  %116 = vmatpush2.msra.mxu0 0.0
  %117 = vmatprep.subr.mxu0 0.0
  %118 = vmatpush2.msra.mxu0 0.0
  %119 = vmatprep.subr.mxu0 0.0
  %120 = vmatpush2.msra.mxu0 0.0
  %121 = vmatprep.subr.mxu0 0.0
  %122 = vmatpush2.msra.mxu0 0.0
  %123 = vmatprep.subr.mxu0 0.0
  %124 = vmatpush2.msra.mxu0 0.0
  %125 = vmatprep.subr.mxu0 0.0
  %126 = vmatpush2.msra.mxu0 0.0
  %127 = vmatprep.subr.mxu0 0.0
  %128 = vmatpush2.msra.mxu0 0.0
  %129 = vmatprep.subr.mxu0 0.0
  %130 = vmatpush2.msra.mxu0 0.0
  %131 = vmatprep.subr.mxu0 0.0
  %132 = vmatpush2.msra.mxu0 0.0
  %133 = vmatprep.subr.mxu0 0.0
  %134 = vmatpush2.msra.mxu0 0.0
  %135 = vmatprep.subr.mxu0 0.0
  %136 = vmatpush2.msra.mxu0 0.0
  %137 = vmatprep.subr.mxu0 0.0
  %138 = vmatpush2.msra.mxu0 0.0
  %139 = vmatprep.subr.mxu0 0.0
  %140 = vmatpush2.msra.mxu0 0.0
  %141 = vmatprep.subr.mxu0 0.0
  %142 = vmatpush2.msra.mxu0 0.0
  %143 = vmatprep.subr.mxu0 0.0
  %144 = vmatpush2.msra.mxu0 0.0
  %145 = vmatprep.subr.mxu0 0.0
  %146 = vmatpush2.msra.mxu0 0.0
  %147 = vmatprep.mubr.f32.mxu0 0.0
  %148 = vmatmul.mubr.f32.gmra.mxu0 %v72
  %v149 = vpop.f32.mrf.mxu0
  %v150 = vadd.f32 0.0, %v149
  %v151 = vpop.f32.mrf.mxu0
  %152 = vmatprep.mubr.f32.mxu0 0.0
  %153 = vmatmul.mubr.f32.gmra.mxu0 %v75
  %v154 = vpop.f32.mrf.mxu0
  %v155 = vadd.f32 0.0, %v154
  %v156 = vpop.f32.mrf.mxu0
  %157 = vmatprep.mubr.f32.mxu0 0.0
  %158 = vmatmul.mubr.f32.gmra.mxu0 %v78
  %v159 = vpop.f32.mrf.mxu0
  %v160 = vadd.f32 0.0, %v159
  %v161 = vpop.f32.mrf.mxu0
  %162 = vmatprep.mubr.f32.mxu0 0.0
  %163 = vmatmul.mubr.f32.gmra.mxu0 %v81
  %v164 = vpop.f32.mrf.mxu0
  %v165 = vadd.f32 0.0, %v164
  %v166 = vpop.f32.mrf.mxu0
  %167 = vdwg.mxu0
  %v168 = vlaneseq
  %v169 = vand.u32 %v168, 127
  %vm170 = vcmp.lt.s32.totalorder %v169, 0
  %v171 = vsub.s32 0, %v169
  %v172 = vsel %vm170, %v171, %v169
  %v173 = vmul.u32.u64.compose %v172, 4042322161
  %v174 = vextract.low.u32 %v173
  %v175 = vextract.high.u32 %v173
  %v176 = vshrl.u32 %v175, 4
  %v177 = vmul.u32 %v176, 17
  %v178 = vsub.s32 %v172, %v177
  %v179 = vsub.s32 0, %v178
  %v180 = vsel %vm170, %v179, %v178
  %vm181 = vcmp.ne.s32.totalorder %v180, 0
  %vm182 = vcmp.lt.s32.totalorder %v180, 0
  %vm183 = vmand %vm182, %vm181
  %v184 = vadd.s32 %v180, 17
  %v185 = vsel %vm183, %v184, %v180
  %vm186 = vcmp.lt.s32.totalorder %v185, 9
  %v187 = vsel %vm186, %v150, 0.0
  %v188 = vsel %vm186, %v155, 0.0
  %v189 = vsel %vm186, %v160, 0.0
  %v190 = vsel %vm186, %v165, 0.0
  %v191 = vmul.f32 %v187, %v187
  %v192 = vmul.f32 %v188, %v188
  %v193 = vmul.f32 %v189, %v189
  %v194 = vmul.f32 %v190, %v190
  %vm195 = vcmask 211968
  %v197 = vsel %vm195, %v187, 0
  %v200 = vsel %vm195, %v188, 0
  %v203 = vsel %vm195, %v189, 0
  %v206 = vsel %vm195, %v190, 0
  %v209 = vsel %vm195, %v191, 0
  %v212 = vsel %vm195, %v192, 0
  %v215 = vsel %vm195, %v193, 0
  %v218 = vsel %vm195, %v194, 0
  %vm220 = vcmask 1041408
  %v222 = vsel %vm220, 1.0, 0
  %224 = vmatprep.subr.mxu0 0.0
  %225 = vmatpush1.msra.mxu0 0.0
  %226 = vmatprep.subr.mxu0 0.0
  %227 = vmatpush1.msra.mxu0 0.0
  %228 = vmatprep.subr.mxu0 0.0
  %229 = vmatpush1.msra.mxu0 0.0
  %230 = vmatprep.subr.mxu0 0.0
  %231 = vmatpush1.msra.mxu0 0.0
  %232 = vmatprep.subr.mxu0 0.0
  %233 = vmatpush1.msra.mxu0 0.0
  %234 = vmatprep.subr.mxu0 0.0
  %235 = vmatpush1.msra.mxu0 0.0
  %236 = vmatprep.subr.mxu0 0.0
  %237 = vmatpush1.msra.mxu0 0.0
  %238 = vmatprep.subr.mxu0 0.0
  %239 = vmatpush1.msra.mxu0 0.0
  %240 = vmatprep.subr.mxu0 0.0
  %241 = vmatpush1.msra.mxu0 0.0
  %242 = vmatprep.subr.mxu0 0.0
  %243 = vmatpush1.msra.mxu0 0.0
  %244 = vmatprep.subr.mxu0 0.0
  %245 = vmatpush1.msra.mxu0 0.0
  %246 = vmatprep.subr.mxu0 0.0
  %247 = vmatpush1.msra.mxu0 0.0
  %248 = vmatprep.subr.mxu0 0.0
  %249 = vmatpush1.msra.mxu0 %v222
  %250 = vmatprep.subr.mxu0 0.0
  %251 = vmatpush1.msra.mxu0 1.0
  %252 = vmatprep.subr.mxu0 0.0
  %253 = vmatpush1.msra.mxu0 1.0
  %254 = vmatprep.subr.mxu0 0.0
  %255 = vmatpush1.msra.mxu0 1.0
  %256 = vmatprep.subr.mxu0 0.0
  %257 = vmatpush2.msra.mxu0 0.0
  %258 = vmatprep.subr.mxu0 0.0
  %259 = vmatpush2.msra.mxu0 0.0
  %260 = vmatprep.subr.mxu0 0.0
  %261 = vmatpush2.msra.mxu0 0.0
  %262 = vmatprep.subr.mxu0 0.0
  %263 = vmatpush2.msra.mxu0 0.0
  %264 = vmatprep.subr.mxu0 0.0
  %265 = vmatpush2.msra.mxu0 0.0
  %266 = vmatprep.subr.mxu0 0.0
  %267 = vmatpush2.msra.mxu0 0.0
  %268 = vmatprep.subr.mxu0 0.0
  %269 = vmatpush2.msra.mxu0 0.0
  %270 = vmatprep.subr.mxu0 0.0
  %271 = vmatpush2.msra.mxu0 0.0
  %272 = vmatprep.subr.mxu0 0.0
  %273 = vmatpush2.msra.mxu0 0.0
  %274 = vmatprep.subr.mxu0 0.0
  %275 = vmatpush2.msra.mxu0 0.0
  %276 = vmatprep.subr.mxu0 0.0
  %277 = vmatpush2.msra.mxu0 0.0
  %278 = vmatprep.subr.mxu0 0.0
  %279 = vmatpush2.msra.mxu0 0.0
  %280 = vmatprep.subr.mxu0 0.0
  %281 = vmatpush2.msra.mxu0 0.0
  %282 = vmatprep.subr.mxu0 0.0
  %283 = vmatpush2.msra.mxu0 0.0
  %284 = vmatprep.subr.mxu0 0.0
  %285 = vmatpush2.msra.mxu0 0.0
  %286 = vmatprep.subr.mxu0 0.0
  %287 = vmatpush2.msra.mxu0 0.0
  %288 = vmatprep.mubr.f32.mxu0 0.0
  %289 = vmatmul.mubr.f32.gmra.mxu0 %v197
  %v290 = vpop.f32.mrf.mxu0
  %v291 = vadd.f32 0.0, %v290
  %v292 = vpop.f32.mrf.mxu0
  %293 = vmatprep.mubr.f32.mxu0 0.0
  %294 = vmatmul.mubr.f32.gmra.mxu0 %v200
  %v295 = vpop.f32.mrf.mxu0
  %v296 = vadd.f32 0.0, %v295
  %v297 = vpop.f32.mrf.mxu0
  %298 = vmatprep.mubr.f32.mxu0 0.0
  %299 = vmatmul.mubr.f32.gmra.mxu0 %v203
  %v300 = vpop.f32.mrf.mxu0
  %v301 = vadd.f32 0.0, %v300
  %v302 = vpop.f32.mrf.mxu0
  %303 = vmatprep.mubr.f32.mxu0 0.0
  %304 = vmatmul.mubr.f32.gmra.mxu0 %v206
  %v305 = vpop.f32.mrf.mxu0
  %v306 = vadd.f32 0.0, %v305
  %v307 = vpop.f32.mrf.mxu0
  %308 = vmatprep.mubr.f32.mxu0 0.0
  %309 = vmatmul.mubr.f32.gmra.mxu0 %v209
  %v310 = vpop.f32.mrf.mxu0
  %v311 = vadd.f32 0.0, %v310
  %v312 = vpop.f32.mrf.mxu0
  %313 = vmatprep.mubr.f32.mxu0 0.0
  %314 = vmatmul.mubr.f32.gmra.mxu0 %v212
  %v315 = vpop.f32.mrf.mxu0
  %v316 = vadd.f32 0.0, %v315
  %v317 = vpop.f32.mrf.mxu0
  %318 = vmatprep.mubr.f32.mxu0 0.0
  %319 = vmatmul.mubr.f32.gmra.mxu0 %v215
  %v320 = vpop.f32.mrf.mxu0
  %v321 = vadd.f32 0.0, %v320
  %v322 = vpop.f32.mrf.mxu0
  %323 = vmatprep.mubr.f32.mxu0 0.0
  %324 = vmatmul.mubr.f32.gmra.mxu0 %v218
  %v325 = vpop.f32.mrf.mxu0
  %v326 = vadd.f32 0.0, %v325
  %v327 = vpop.f32.mrf.mxu0
  %328 = vdwg.mxu0
  %v329 = vmul.f32 %v291, 0.055555556
  %v330 = vmul.f32 %v296, 0.055555556
  %v331 = vmul.f32 %v301, 0.055555556
  %v332 = vmul.f32 %v306, 0.055555556
  %v333 = vmul.f32 %v311, 0.055555556
  %v334 = vmul.f32 %v316, 0.055555556
  %v335 = vmul.f32 %v321, 0.055555556
  %v336 = vmul.f32 %v326, 0.055555556
  %v337 = vmul.f32 %v329, %v329
  %v338 = vmul.f32 %v330, %v330
  %v339 = vmul.f32 %v331, %v331
  %v340 = vmul.f32 %v332, %v332
  %v341 = vsub.f32 %v333, %v337
  %v342 = vsub.f32 %v334, %v338
  %v343 = vsub.f32 %v335, %v339
  %v344 = vsub.f32 %v336, %v340
  %v345 = vmax.f32 %v341, 0.0
  %v346 = vmax.f32 %v342, 0.0
  %v347 = vmax.f32 %v343, 0.0
  %v348 = vmax.f32 %v344, 0.0
  %v349 = vadd.f32 %v345, 1e-05
  %v350 = vadd.f32 %v346, 1e-05
  %v351 = vadd.f32 %v347, 1e-05
  %v352 = vadd.f32 %v348, 1e-05
  %v353 = vrsqrt.pop %v349
  %v354 = vrsqrt.pop %v350
  %v355 = vrsqrt.pop %v351
  %v356 = vrsqrt.pop %v352
  %v357 = vmul.f32 %v17, %v353
  %v358 = vmul.f32 %v18, %v354
  %v359 = vmul.f32 %v19, %v355
  %v360 = vmul.f32 %v20, %v356
  %v361 = vmul.f32 %v329, %v357
  %v362 = vmul.f32 %v330, %v358
  %v363 = vmul.f32 %v331, %v359
  %v364 = vmul.f32 %v332, %v360
  %369 = vrot.lane.b32.xlu0 %v361, 1
  %v370 = vpop.permute.xlu0 %369
  %371 = vrot.lane.b32.xlu0 %v362, 1
  %v372 = vpop.permute.xlu0 %371
  %373 = vrot.lane.b32.xlu0 %v363, 1
  %v374 = vpop.permute.xlu0 %373
  %375 = vrot.lane.b32.xlu0 %v364, 1
  %v376 = vpop.permute.xlu0 %375
  %v381 = vsub.f32 %v17, %v370
  %v382 = vsub.f32 %v18, %v372
  %v383 = vsub.f32 %v19, %v374
  %v384 = vsub.f32 %v20, %v376
  %386 = vset.pattern.permute.xlu0 0
  %387 = vperm.xlu0 %386, %v357
  %v388 = vpop.permute.xlu0 %387
  %391 = vset.pattern.permute.xlu0 0
  %392 = vperm.xlu0 %391, %v358
  %v393 = vpop.permute.xlu0 %392
  %396 = vset.pattern.permute.xlu0 0
  %397 = vperm.xlu0 %396, %v359
  %v398 = vpop.permute.xlu0 %397
  %401 = vset.pattern.permute.xlu0 0
  %402 = vperm.xlu0 %401, %v360
  %v403 = vpop.permute.xlu0 %402
  %v405 = vmul.f32 %v187, %v388
  %v406 = vmul.f32 %v188, %v393
  %v407 = vmul.f32 %v189, %v398
  %v408 = vmul.f32 %v190, %v403
  %410 = vset.pattern.permute.xlu0 1
  %411 = vperm.xlu0 %410, %v381
  %v412 = vpop.permute.xlu0 %411
  %415 = vset.pattern.permute.xlu0 1
  %416 = vperm.xlu0 %415, %v382
  %v417 = vpop.permute.xlu0 %416
  %420 = vset.pattern.permute.xlu0 1
  %421 = vperm.xlu0 %420, %v383
  %v422 = vpop.permute.xlu0 %421
  %425 = vset.pattern.permute.xlu0 1
  %426 = vperm.xlu0 %425, %v384
  %v427 = vpop.permute.xlu0 %426
  %v429 = vadd.f32 %v405, %v412
  %v430 = vadd.f32 %v406, %v417
  %v431 = vadd.f32 %v407, %v422
  %v432 = vadd.f32 %v408, %v427
  %vm433 = vcmp.gt.f32.partialorder %v429, 0.0
  %vm434 = vcmp.gt.f32.partialorder %v430, 0.0
  %vm435 = vcmp.gt.f32.partialorder %v431, 0.0
  %vm436 = vcmp.gt.f32.partialorder %v432, 0.0
  %v437 = vmin.f32 %v429, 0.0
  %v438 = vmin.f32 %v430, 0.0
  %v439 = vmin.f32 %v431, 0.0
  %v440 = vmin.f32 %v432, 0.0
  %v441 = vmul.f32 %v437, 1.442695
  %v442 = vpow.pop %v441
  %v443 = vmul.f32 %v438, 1.442695
  %v444 = vpow.pop %v443
  %v445 = vmul.f32 %v439, 1.442695
  %v446 = vpow.pop %v445
  %v447 = vmul.f32 %v440, 1.442695
  %v448 = vpow.pop %v447
  %v449 = vsub.f32 %v442, 1.0
  %v450 = vsub.f32 %v444, 1.0
  %v451 = vsub.f32 %v446, 1.0
  %v452 = vsub.f32 %v448, 1.0
  %v453 = vsel %vm433, %v429, %v449
  %v454 = vsel %vm434, %v430, %v450
  %v455 = vsel %vm435, %v431, %v451
  %v456 = vsel %vm436, %v432, %v452
  %v457 = vsel %vm186, %v453, 0.0
  %v458 = vsel %vm186, %v454, 0.0
  %v459 = vsel %vm186, %v455, 0.0
  %v460 = vsel %vm186, %v456, 0.0
  %465 = vrot.lane.b32.xlu0 %v457, 4
  %v466 = vpop.permute.xlu0 %465
  %467 = vrot.lane.b32.xlu0 %v458, 4
  %v468 = vpop.permute.xlu0 %467
  %469 = vrot.lane.b32.xlu0 %v459, 4
  %v470 = vpop.permute.xlu0 %469
  %471 = vrot.lane.b32.xlu0 %v460, 4
  %v472 = vpop.permute.xlu0 %471
  %v477 = vsel %vm31, 0.0, %v466
  %v478 = vsel %vm31, 0.0, %v468
  %v479 = vsel %vm31, 0.0, %v470
  %v480 = vsel %vm31, 0.0, %v472
  %v481 = vsel %vm39, %v477, 0.0
  %v482 = vsel %vm39, %v478, 0.0
  %v483 = vsel %vm39, %v479, 0.0
  %v484 = vsel %vm39, %v480, 0.0
  %v485 = vld [vmem:[%s2] sm:$0xff]
  %v486 = vld [vmem:[%s2 + $0x8] sm:$0xff]
  %v487 = vld [vmem:[%s2 + $0x10] sm:$0xff]
  %v488 = vld [vmem:[%s2 + $0x18] sm:$0xff]
  %v489 = vld [vmem:[%s2 + $0x20] sm:$0xff]
  %v490 = vld [vmem:[%s2 + $0x28] sm:$0xff]
  %v491 = vld [vmem:[%s2 + $0x30] sm:$0xff]
  %v492 = vld [vmem:[%s2 + $0x38] sm:$0xff]
  %v493 = vld [vmem:[%s2 + $0x40] sm:$0xff]
  %498 = vrot.lane.b32.xlu0 %v481, 127
  %v499 = vpop.permute.xlu0 %498
  %500 = vrot.lane.b32.xlu0 %v482, 127
  %v501 = vpop.permute.xlu0 %500
  %502 = vrot.lane.b32.xlu0 %v483, 127
  %v503 = vpop.permute.xlu0 %502
  %504 = vrot.lane.b32.xlu0 %v484, 127
  %v505 = vpop.permute.xlu0 %504
  %vm510 = vcmask 261120
  %v512 = vsel %vm510, %v486, 0
  %514 = vmatprep.subr.mxu0 0.0
  %515 = vmatpush1.msra.mxu0 0.0
  %516 = vmatprep.subr.mxu0 0.0
  %517 = vmatpush1.msra.mxu0 0.0
  %518 = vmatprep.subr.mxu0 0.0
  %519 = vmatpush1.msra.mxu0 0.0
  %520 = vmatprep.subr.mxu0 0.0
  %521 = vmatpush1.msra.mxu0 0.0
  %522 = vmatprep.subr.mxu0 0.0
  %523 = vmatpush1.msra.mxu0 0.0
  %524 = vmatprep.subr.mxu0 0.0
  %525 = vmatpush1.msra.mxu0 0.0
  %526 = vmatprep.subr.mxu0 0.0
  %527 = vmatpush1.msra.mxu0 0.0
  %528 = vmatprep.subr.mxu0 0.0
  %529 = vmatpush1.msra.mxu0 0.0
  %530 = vmatprep.subr.mxu0 0.0
  %531 = vmatpush1.msra.mxu0 0.0
  %532 = vmatprep.subr.mxu0 0.0
  %533 = vmatpush1.msra.mxu0 0.0
  %534 = vmatprep.subr.mxu0 0.0
  %535 = vmatpush1.msra.mxu0 0.0
  %536 = vmatprep.subr.mxu0 0.0
  %537 = vmatpush1.msra.mxu0 0.0
  %538 = vmatprep.subr.mxu0 0.0
  %539 = vmatpush1.msra.mxu0 %v505
  %540 = vmatprep.subr.mxu0 0.0
  %541 = vmatpush1.msra.mxu0 %v503
  %542 = vmatprep.subr.mxu0 0.0
  %543 = vmatpush1.msra.mxu0 %v501
  %544 = vmatprep.subr.mxu0 0.0
  %545 = vmatpush1.msra.mxu0 %v499
  %546 = vmatprep.subr.mxu0 0.0
  %547 = vmatpush2.msra.mxu0 0.0
  %548 = vmatprep.subr.mxu0 0.0
  %549 = vmatpush2.msra.mxu0 0.0
  %550 = vmatprep.subr.mxu0 0.0
  %551 = vmatpush2.msra.mxu0 0.0
  %552 = vmatprep.subr.mxu0 0.0
  %553 = vmatpush2.msra.mxu0 0.0
  %554 = vmatprep.subr.mxu0 0.0
  %555 = vmatpush2.msra.mxu0 0.0
  %556 = vmatprep.subr.mxu0 0.0
  %557 = vmatpush2.msra.mxu0 0.0
  %558 = vmatprep.subr.mxu0 0.0
  %559 = vmatpush2.msra.mxu0 0.0
  %560 = vmatprep.subr.mxu0 0.0
  %561 = vmatpush2.msra.mxu0 0.0
  %562 = vmatprep.subr.mxu0 0.0
  %563 = vmatpush2.msra.mxu0 0.0
  %564 = vmatprep.subr.mxu0 0.0
  %565 = vmatpush2.msra.mxu0 0.0
  %566 = vmatprep.subr.mxu0 0.0
  %567 = vmatpush2.msra.mxu0 0.0
  %568 = vmatprep.subr.mxu0 0.0
  %569 = vmatpush2.msra.mxu0 0.0
  %570 = vmatprep.subr.mxu0 0.0
  %571 = vmatpush2.msra.mxu0 0.0
  %572 = vmatprep.subr.mxu0 0.0
  %573 = vmatpush2.msra.mxu0 0.0
  %574 = vmatprep.subr.mxu0 0.0
  %575 = vmatpush2.msra.mxu0 0.0
  %576 = vmatprep.subr.mxu0 0.0
  %577 = vmatpush2.msra.mxu0 0.0
  %578 = vmatprep.mubr.f32.mxu0 0.0
  %579 = vmatmul.mubr.f32.gmra.mxu0 %v512
  %v580 = vpop.f32.mrf.mxu0
  %v581 = vadd.f32 0.0, %v580
  %v582 = vpop.f32.mrf.mxu0
  %583 = vdwg.mxu0
  %v585 = vsel %vm510, %v485, 0
  %587 = vmatprep.subr.mxu0 0.0
  %588 = vmatpush1.msra.mxu0 0.0
  %589 = vmatprep.subr.mxu0 0.0
  %590 = vmatpush1.msra.mxu0 0.0
  %591 = vmatprep.subr.mxu0 0.0
  %592 = vmatpush1.msra.mxu0 0.0
  %593 = vmatprep.subr.mxu0 0.0
  %594 = vmatpush1.msra.mxu0 0.0
  %595 = vmatprep.subr.mxu0 0.0
  %596 = vmatpush1.msra.mxu0 0.0
  %597 = vmatprep.subr.mxu0 0.0
  %598 = vmatpush1.msra.mxu0 0.0
  %599 = vmatprep.subr.mxu0 0.0
  %600 = vmatpush1.msra.mxu0 0.0
  %601 = vmatprep.subr.mxu0 0.0
  %602 = vmatpush1.msra.mxu0 0.0
  %603 = vmatprep.subr.mxu0 0.0
  %604 = vmatpush1.msra.mxu0 0.0
  %605 = vmatprep.subr.mxu0 0.0
  %606 = vmatpush1.msra.mxu0 0.0
  %607 = vmatprep.subr.mxu0 0.0
  %608 = vmatpush1.msra.mxu0 0.0
  %609 = vmatprep.subr.mxu0 0.0
  %610 = vmatpush1.msra.mxu0 0.0
  %611 = vmatprep.subr.mxu0 0.0
  %612 = vmatpush1.msra.mxu0 %v484
  %613 = vmatprep.subr.mxu0 0.0
  %614 = vmatpush1.msra.mxu0 %v483
  %615 = vmatprep.subr.mxu0 0.0
  %616 = vmatpush1.msra.mxu0 %v482
  %617 = vmatprep.subr.mxu0 0.0
  %618 = vmatpush1.msra.mxu0 %v481
  %619 = vmatprep.subr.mxu0 0.0
  %620 = vmatpush2.msra.mxu0 0.0
  %621 = vmatprep.subr.mxu0 0.0
  %622 = vmatpush2.msra.mxu0 0.0
  %623 = vmatprep.subr.mxu0 0.0
  %624 = vmatpush2.msra.mxu0 0.0
  %625 = vmatprep.subr.mxu0 0.0
  %626 = vmatpush2.msra.mxu0 0.0
  %627 = vmatprep.subr.mxu0 0.0
  %628 = vmatpush2.msra.mxu0 0.0
  %629 = vmatprep.subr.mxu0 0.0
  %630 = vmatpush2.msra.mxu0 0.0
  %631 = vmatprep.subr.mxu0 0.0
  %632 = vmatpush2.msra.mxu0 0.0
  %633 = vmatprep.subr.mxu0 0.0
  %634 = vmatpush2.msra.mxu0 0.0
  %635 = vmatprep.subr.mxu0 0.0
  %636 = vmatpush2.msra.mxu0 0.0
  %637 = vmatprep.subr.mxu0 0.0
  %638 = vmatpush2.msra.mxu0 0.0
  %639 = vmatprep.subr.mxu0 0.0
  %640 = vmatpush2.msra.mxu0 0.0
  %641 = vmatprep.subr.mxu0 0.0
  %642 = vmatpush2.msra.mxu0 0.0
  %643 = vmatprep.subr.mxu0 0.0
  %644 = vmatpush2.msra.mxu0 0.0
  %645 = vmatprep.subr.mxu0 0.0
  %646 = vmatpush2.msra.mxu0 0.0
  %647 = vmatprep.subr.mxu0 0.0
  %648 = vmatpush2.msra.mxu0 0.0
  %649 = vmatprep.subr.mxu0 0.0
  %650 = vmatpush2.msra.mxu0 0.0
  %651 = vmatprep.mubr.f32.mxu0 0.0
  %652 = vmatmul.mubr.f32.gmra.mxu0 %v585
  %v653 = vpop.f32.mrf.mxu0
  %v654 = vadd.f32 %v581, %v653
  %v655 = vpop.f32.mrf.mxu0
  %656 = vdwg.mxu0
  %657 = vrot.lane.b32.xlu0 %v481, 126
  %v658 = vpop.permute.xlu0 %657
  %659 = vrot.lane.b32.xlu0 %v482, 126
  %v660 = vpop.permute.xlu0 %659
  %661 = vrot.lane.b32.xlu0 %v483, 126
  %v662 = vpop.permute.xlu0 %661
  %663 = vrot.lane.b32.xlu0 %v484, 126
  %v664 = vpop.permute.xlu0 %663
  %v670 = vsel %vm510, %v487, 0
  %672 = vmatprep.subr.mxu0 0.0
  %673 = vmatpush1.msra.mxu0 0.0
  %674 = vmatprep.subr.mxu0 0.0
  %675 = vmatpush1.msra.mxu0 0.0
  %676 = vmatprep.subr.mxu0 0.0
  %677 = vmatpush1.msra.mxu0 0.0
  %678 = vmatprep.subr.mxu0 0.0
  %679 = vmatpush1.msra.mxu0 0.0
  %680 = vmatprep.subr.mxu0 0.0
  %681 = vmatpush1.msra.mxu0 0.0
  %682 = vmatprep.subr.mxu0 0.0
  %683 = vmatpush1.msra.mxu0 0.0
  %684 = vmatprep.subr.mxu0 0.0
  %685 = vmatpush1.msra.mxu0 0.0
  %686 = vmatprep.subr.mxu0 0.0
  %687 = vmatpush1.msra.mxu0 0.0
  %688 = vmatprep.subr.mxu0 0.0
  %689 = vmatpush1.msra.mxu0 0.0
  %690 = vmatprep.subr.mxu0 0.0
  %691 = vmatpush1.msra.mxu0 0.0
  %692 = vmatprep.subr.mxu0 0.0
  %693 = vmatpush1.msra.mxu0 0.0
  %694 = vmatprep.subr.mxu0 0.0
  %695 = vmatpush1.msra.mxu0 0.0
  %696 = vmatprep.subr.mxu0 0.0
  %697 = vmatpush1.msra.mxu0 %v664
  %698 = vmatprep.subr.mxu0 0.0
  %699 = vmatpush1.msra.mxu0 %v662
  %700 = vmatprep.subr.mxu0 0.0
  %701 = vmatpush1.msra.mxu0 %v660
  %702 = vmatprep.subr.mxu0 0.0
  %703 = vmatpush1.msra.mxu0 %v658
  %704 = vmatprep.subr.mxu0 0.0
  %705 = vmatpush2.msra.mxu0 0.0
  %706 = vmatprep.subr.mxu0 0.0
  %707 = vmatpush2.msra.mxu0 0.0
  %708 = vmatprep.subr.mxu0 0.0
  %709 = vmatpush2.msra.mxu0 0.0
  %710 = vmatprep.subr.mxu0 0.0
  %711 = vmatpush2.msra.mxu0 0.0
  %712 = vmatprep.subr.mxu0 0.0
  %713 = vmatpush2.msra.mxu0 0.0
  %714 = vmatprep.subr.mxu0 0.0
  %715 = vmatpush2.msra.mxu0 0.0
  %716 = vmatprep.subr.mxu0 0.0
  %717 = vmatpush2.msra.mxu0 0.0
  %718 = vmatprep.subr.mxu0 0.0
  %719 = vmatpush2.msra.mxu0 0.0
  %720 = vmatprep.subr.mxu0 0.0
  %721 = vmatpush2.msra.mxu0 0.0
  %722 = vmatprep.subr.mxu0 0.0
  %723 = vmatpush2.msra.mxu0 0.0
  %724 = vmatprep.subr.mxu0 0.0
  %725 = vmatpush2.msra.mxu0 0.0
  %726 = vmatprep.subr.mxu0 0.0
  %727 = vmatpush2.msra.mxu0 0.0
  %728 = vmatprep.subr.mxu0 0.0
  %729 = vmatpush2.msra.mxu0 0.0
  %730 = vmatprep.subr.mxu0 0.0
  %731 = vmatpush2.msra.mxu0 0.0
  %732 = vmatprep.subr.mxu0 0.0
  %733 = vmatpush2.msra.mxu0 0.0
  %734 = vmatprep.subr.mxu0 0.0
  %735 = vmatpush2.msra.mxu0 0.0
  %736 = vmatprep.mubr.f32.mxu0 0.0
  %737 = vmatmul.mubr.f32.gmra.mxu0 %v670
  %v738 = vpop.f32.mrf.mxu0
  %v739 = vadd.f32 0.0, %v738
  %v740 = vpop.f32.mrf.mxu0
  %741 = vdwg.mxu0
  %v742 = vadd.f32 %v654, %v739
  %743 = vrot.lane.b32.xlu0 %v481, 125
  %v744 = vpop.permute.xlu0 %743
  %745 = vrot.lane.b32.xlu0 %v482, 125
  %v746 = vpop.permute.xlu0 %745
  %747 = vrot.lane.b32.xlu0 %v483, 125
  %v748 = vpop.permute.xlu0 %747
  %749 = vrot.lane.b32.xlu0 %v484, 125
  %v750 = vpop.permute.xlu0 %749
  %v756 = vsel %vm510, %v488, 0
  %758 = vmatprep.subr.mxu0 0.0
  %759 = vmatpush1.msra.mxu0 0.0
  %760 = vmatprep.subr.mxu0 0.0
  %761 = vmatpush1.msra.mxu0 0.0
  %762 = vmatprep.subr.mxu0 0.0
  %763 = vmatpush1.msra.mxu0 0.0
  %764 = vmatprep.subr.mxu0 0.0
  %765 = vmatpush1.msra.mxu0 0.0
  %766 = vmatprep.subr.mxu0 0.0
  %767 = vmatpush1.msra.mxu0 0.0
  %768 = vmatprep.subr.mxu0 0.0
  %769 = vmatpush1.msra.mxu0 0.0
  %770 = vmatprep.subr.mxu0 0.0
  %771 = vmatpush1.msra.mxu0 0.0
  %772 = vmatprep.subr.mxu0 0.0
  %773 = vmatpush1.msra.mxu0 0.0
  %774 = vmatprep.subr.mxu0 0.0
  %775 = vmatpush1.msra.mxu0 0.0
  %776 = vmatprep.subr.mxu0 0.0
  %777 = vmatpush1.msra.mxu0 0.0
  %778 = vmatprep.subr.mxu0 0.0
  %779 = vmatpush1.msra.mxu0 0.0
  %780 = vmatprep.subr.mxu0 0.0
  %781 = vmatpush1.msra.mxu0 0.0
  %782 = vmatprep.subr.mxu0 0.0
  %783 = vmatpush1.msra.mxu0 %v750
  %784 = vmatprep.subr.mxu0 0.0
  %785 = vmatpush1.msra.mxu0 %v748
  %786 = vmatprep.subr.mxu0 0.0
  %787 = vmatpush1.msra.mxu0 %v746
  %788 = vmatprep.subr.mxu0 0.0
  %789 = vmatpush1.msra.mxu0 %v744
  %790 = vmatprep.subr.mxu0 0.0
  %791 = vmatpush2.msra.mxu0 0.0
  %792 = vmatprep.subr.mxu0 0.0
  %793 = vmatpush2.msra.mxu0 0.0
  %794 = vmatprep.subr.mxu0 0.0
  %795 = vmatpush2.msra.mxu0 0.0
  %796 = vmatprep.subr.mxu0 0.0
  %797 = vmatpush2.msra.mxu0 0.0
  %798 = vmatprep.subr.mxu0 0.0
  %799 = vmatpush2.msra.mxu0 0.0
  %800 = vmatprep.subr.mxu0 0.0
  %801 = vmatpush2.msra.mxu0 0.0
  %802 = vmatprep.subr.mxu0 0.0
  %803 = vmatpush2.msra.mxu0 0.0
  %804 = vmatprep.subr.mxu0 0.0
  %805 = vmatpush2.msra.mxu0 0.0
  %806 = vmatprep.subr.mxu0 0.0
  %807 = vmatpush2.msra.mxu0 0.0
  %808 = vmatprep.subr.mxu0 0.0
  %809 = vmatpush2.msra.mxu0 0.0
  %810 = vmatprep.subr.mxu0 0.0
  %811 = vmatpush2.msra.mxu0 0.0
  %812 = vmatprep.subr.mxu0 0.0
  %813 = vmatpush2.msra.mxu0 0.0
  %814 = vmatprep.subr.mxu0 0.0
  %815 = vmatpush2.msra.mxu0 0.0
  %816 = vmatprep.subr.mxu0 0.0
  %817 = vmatpush2.msra.mxu0 0.0
  %818 = vmatprep.subr.mxu0 0.0
  %819 = vmatpush2.msra.mxu0 0.0
  %820 = vmatprep.subr.mxu0 0.0
  %821 = vmatpush2.msra.mxu0 0.0
  %822 = vmatprep.mubr.f32.mxu0 0.0
  %823 = vmatmul.mubr.f32.gmra.mxu0 %v756
  %v824 = vpop.f32.mrf.mxu0
  %v825 = vadd.f32 0.0, %v824
  %v826 = vpop.f32.mrf.mxu0
  %827 = vdwg.mxu0
  %v828 = vadd.f32 %v742, %v825
  %829 = vrot.lane.b32.xlu0 %v481, 124
  %v830 = vpop.permute.xlu0 %829
  %831 = vrot.lane.b32.xlu0 %v482, 124
  %v832 = vpop.permute.xlu0 %831
  %833 = vrot.lane.b32.xlu0 %v483, 124
  %v834 = vpop.permute.xlu0 %833
  %835 = vrot.lane.b32.xlu0 %v484, 124
  %v836 = vpop.permute.xlu0 %835
  %v842 = vsel %vm510, %v489, 0
  %844 = vmatprep.subr.mxu0 0.0
  %845 = vmatpush1.msra.mxu0 0.0
  %846 = vmatprep.subr.mxu0 0.0
  %847 = vmatpush1.msra.mxu0 0.0
  %848 = vmatprep.subr.mxu0 0.0
  %849 = vmatpush1.msra.mxu0 0.0
  %850 = vmatprep.subr.mxu0 0.0
  %851 = vmatpush1.msra.mxu0 0.0
  %852 = vmatprep.subr.mxu0 0.0
  %853 = vmatpush1.msra.mxu0 0.0
  %854 = vmatprep.subr.mxu0 0.0
  %855 = vmatpush1.msra.mxu0 0.0
  %856 = vmatprep.subr.mxu0 0.0
  %857 = vmatpush1.msra.mxu0 0.0
  %858 = vmatprep.subr.mxu0 0.0
  %859 = vmatpush1.msra.mxu0 0.0
  %860 = vmatprep.subr.mxu0 0.0
  %861 = vmatpush1.msra.mxu0 0.0
  %862 = vmatprep.subr.mxu0 0.0
  %863 = vmatpush1.msra.mxu0 0.0
  %864 = vmatprep.subr.mxu0 0.0
  %865 = vmatpush1.msra.mxu0 0.0
  %866 = vmatprep.subr.mxu0 0.0
  %867 = vmatpush1.msra.mxu0 0.0
  %868 = vmatprep.subr.mxu0 0.0
  %869 = vmatpush1.msra.mxu0 %v836
  %870 = vmatprep.subr.mxu0 0.0
  %871 = vmatpush1.msra.mxu0 %v834
  %872 = vmatprep.subr.mxu0 0.0
  %873 = vmatpush1.msra.mxu0 %v832
  %874 = vmatprep.subr.mxu0 0.0
  %875 = vmatpush1.msra.mxu0 %v830
  %876 = vmatprep.subr.mxu0 0.0
  %877 = vmatpush2.msra.mxu0 0.0
  %878 = vmatprep.subr.mxu0 0.0
  %879 = vmatpush2.msra.mxu0 0.0
  %880 = vmatprep.subr.mxu0 0.0
  %881 = vmatpush2.msra.mxu0 0.0
  %882 = vmatprep.subr.mxu0 0.0
  %883 = vmatpush2.msra.mxu0 0.0
  %884 = vmatprep.subr.mxu0 0.0
  %885 = vmatpush2.msra.mxu0 0.0
  %886 = vmatprep.subr.mxu0 0.0
  %887 = vmatpush2.msra.mxu0 0.0
  %888 = vmatprep.subr.mxu0 0.0
  %889 = vmatpush2.msra.mxu0 0.0
  %890 = vmatprep.subr.mxu0 0.0
  %891 = vmatpush2.msra.mxu0 0.0
  %892 = vmatprep.subr.mxu0 0.0
  %893 = vmatpush2.msra.mxu0 0.0
  %894 = vmatprep.subr.mxu0 0.0
  %895 = vmatpush2.msra.mxu0 0.0
  %896 = vmatprep.subr.mxu0 0.0
  %897 = vmatpush2.msra.mxu0 0.0
  %898 = vmatprep.subr.mxu0 0.0
  %899 = vmatpush2.msra.mxu0 0.0
  %900 = vmatprep.subr.mxu0 0.0
  %901 = vmatpush2.msra.mxu0 0.0
  %902 = vmatprep.subr.mxu0 0.0
  %903 = vmatpush2.msra.mxu0 0.0
  %904 = vmatprep.subr.mxu0 0.0
  %905 = vmatpush2.msra.mxu0 0.0
  %906 = vmatprep.subr.mxu0 0.0
  %907 = vmatpush2.msra.mxu0 0.0
  %908 = vmatprep.mubr.f32.mxu0 0.0
  %909 = vmatmul.mubr.f32.gmra.mxu0 %v842
  %v910 = vpop.f32.mrf.mxu0
  %v911 = vadd.f32 0.0, %v910
  %v912 = vpop.f32.mrf.mxu0
  %913 = vdwg.mxu0
  %v914 = vadd.f32 %v828, %v911
  %915 = vrot.lane.b32.xlu0 %v481, 123
  %v916 = vpop.permute.xlu0 %915
  %917 = vrot.lane.b32.xlu0 %v482, 123
  %v918 = vpop.permute.xlu0 %917
  %919 = vrot.lane.b32.xlu0 %v483, 123
  %v920 = vpop.permute.xlu0 %919
  %921 = vrot.lane.b32.xlu0 %v484, 123
  %v922 = vpop.permute.xlu0 %921
  %v928 = vsel %vm510, %v490, 0
  %930 = vmatprep.subr.mxu0 0.0
  %931 = vmatpush1.msra.mxu0 0.0
  %932 = vmatprep.subr.mxu0 0.0
  %933 = vmatpush1.msra.mxu0 0.0
  %934 = vmatprep.subr.mxu0 0.0
  %935 = vmatpush1.msra.mxu0 0.0
  %936 = vmatprep.subr.mxu0 0.0
  %937 = vmatpush1.msra.mxu0 0.0
  %938 = vmatprep.subr.mxu0 0.0
  %939 = vmatpush1.msra.mxu0 0.0
  %940 = vmatprep.subr.mxu0 0.0
  %941 = vmatpush1.msra.mxu0 0.0
  %942 = vmatprep.subr.mxu0 0.0
  %943 = vmatpush1.msra.mxu0 0.0
  %944 = vmatprep.subr.mxu0 0.0
  %945 = vmatpush1.msra.mxu0 0.0
  %946 = vmatprep.subr.mxu0 0.0
  %947 = vmatpush1.msra.mxu0 0.0
  %948 = vmatprep.subr.mxu0 0.0
  %949 = vmatpush1.msra.mxu0 0.0
  %950 = vmatprep.subr.mxu0 0.0
  %951 = vmatpush1.msra.mxu0 0.0
  %952 = vmatprep.subr.mxu0 0.0
  %953 = vmatpush1.msra.mxu0 0.0
  %954 = vmatprep.subr.mxu0 0.0
  %955 = vmatpush1.msra.mxu0 %v922
  %956 = vmatprep.subr.mxu0 0.0
  %957 = vmatpush1.msra.mxu0 %v920
  %958 = vmatprep.subr.mxu0 0.0
  %959 = vmatpush1.msra.mxu0 %v918
  %960 = vmatprep.subr.mxu0 0.0
  %961 = vmatpush1.msra.mxu0 %v916
  %962 = vmatprep.subr.mxu0 0.0
  %963 = vmatpush2.msra.mxu0 0.0
  %964 = vmatprep.subr.mxu0 0.0
  %965 = vmatpush2.msra.mxu0 0.0
  %966 = vmatprep.subr.mxu0 0.0
  %967 = vmatpush2.msra.mxu0 0.0
  %968 = vmatprep.subr.mxu0 0.0
  %969 = vmatpush2.msra.mxu0 0.0
  %970 = vmatprep.subr.mxu0 0.0
  %971 = vmatpush2.msra.mxu0 0.0
  %972 = vmatprep.subr.mxu0 0.0
  %973 = vmatpush2.msra.mxu0 0.0
  %974 = vmatprep.subr.mxu0 0.0
  %975 = vmatpush2.msra.mxu0 0.0
  %976 = vmatprep.subr.mxu0 0.0
  %977 = vmatpush2.msra.mxu0 0.0
  %978 = vmatprep.subr.mxu0 0.0
  %979 = vmatpush2.msra.mxu0 0.0
  %980 = vmatprep.subr.mxu0 0.0
  %981 = vmatpush2.msra.mxu0 0.0
  %982 = vmatprep.subr.mxu0 0.0
  %983 = vmatpush2.msra.mxu0 0.0
  %984 = vmatprep.subr.mxu0 0.0
  %985 = vmatpush2.msra.mxu0 0.0
  %986 = vmatprep.subr.mxu0 0.0
  %987 = vmatpush2.msra.mxu0 0.0
  %988 = vmatprep.subr.mxu0 0.0
  %989 = vmatpush2.msra.mxu0 0.0
  %990 = vmatprep.subr.mxu0 0.0
  %991 = vmatpush2.msra.mxu0 0.0
  %992 = vmatprep.subr.mxu0 0.0
  %993 = vmatpush2.msra.mxu0 0.0
  %994 = vmatprep.mubr.f32.mxu0 0.0
  %995 = vmatmul.mubr.f32.gmra.mxu0 %v928
  %v996 = vpop.f32.mrf.mxu0
  %v997 = vadd.f32 0.0, %v996
  %v998 = vpop.f32.mrf.mxu0
  %999 = vdwg.mxu0
  %v1000 = vadd.f32 %v914, %v997
  %1001 = vrot.lane.b32.xlu0 %v481, 122
  %v1002 = vpop.permute.xlu0 %1001
  %1003 = vrot.lane.b32.xlu0 %v482, 122
  %v1004 = vpop.permute.xlu0 %1003
  %1005 = vrot.lane.b32.xlu0 %v483, 122
  %v1006 = vpop.permute.xlu0 %1005
  %1007 = vrot.lane.b32.xlu0 %v484, 122
  %v1008 = vpop.permute.xlu0 %1007
  %v1014 = vsel %vm510, %v491, 0
  %1016 = vmatprep.subr.mxu0 0.0
  %1017 = vmatpush1.msra.mxu0 0.0
  %1018 = vmatprep.subr.mxu0 0.0
  %1019 = vmatpush1.msra.mxu0 0.0
  %1020 = vmatprep.subr.mxu0 0.0
  %1021 = vmatpush1.msra.mxu0 0.0
  %1022 = vmatprep.subr.mxu0 0.0
  %1023 = vmatpush1.msra.mxu0 0.0
  %1024 = vmatprep.subr.mxu0 0.0
  %1025 = vmatpush1.msra.mxu0 0.0
  %1026 = vmatprep.subr.mxu0 0.0
  %1027 = vmatpush1.msra.mxu0 0.0
  %1028 = vmatprep.subr.mxu0 0.0
  %1029 = vmatpush1.msra.mxu0 0.0
  %1030 = vmatprep.subr.mxu0 0.0
  %1031 = vmatpush1.msra.mxu0 0.0
  %1032 = vmatprep.subr.mxu0 0.0
  %1033 = vmatpush1.msra.mxu0 0.0
  %1034 = vmatprep.subr.mxu0 0.0
  %1035 = vmatpush1.msra.mxu0 0.0
  %1036 = vmatprep.subr.mxu0 0.0
  %1037 = vmatpush1.msra.mxu0 0.0
  %1038 = vmatprep.subr.mxu0 0.0
  %1039 = vmatpush1.msra.mxu0 0.0
  %1040 = vmatprep.subr.mxu0 0.0
  %1041 = vmatpush1.msra.mxu0 %v1008
  %1042 = vmatprep.subr.mxu0 0.0
  %1043 = vmatpush1.msra.mxu0 %v1006
  %1044 = vmatprep.subr.mxu0 0.0
  %1045 = vmatpush1.msra.mxu0 %v1004
  %1046 = vmatprep.subr.mxu0 0.0
  %1047 = vmatpush1.msra.mxu0 %v1002
  %1048 = vmatprep.subr.mxu0 0.0
  %1049 = vmatpush2.msra.mxu0 0.0
  %1050 = vmatprep.subr.mxu0 0.0
  %1051 = vmatpush2.msra.mxu0 0.0
  %1052 = vmatprep.subr.mxu0 0.0
  %1053 = vmatpush2.msra.mxu0 0.0
  %1054 = vmatprep.subr.mxu0 0.0
  %1055 = vmatpush2.msra.mxu0 0.0
  %1056 = vmatprep.subr.mxu0 0.0
  %1057 = vmatpush2.msra.mxu0 0.0
  %1058 = vmatprep.subr.mxu0 0.0
  %1059 = vmatpush2.msra.mxu0 0.0
  %1060 = vmatprep.subr.mxu0 0.0
  %1061 = vmatpush2.msra.mxu0 0.0
  %1062 = vmatprep.subr.mxu0 0.0
  %1063 = vmatpush2.msra.mxu0 0.0
  %1064 = vmatprep.subr.mxu0 0.0
  %1065 = vmatpush2.msra.mxu0 0.0
  %1066 = vmatprep.subr.mxu0 0.0
  %1067 = vmatpush2.msra.mxu0 0.0
  %1068 = vmatprep.subr.mxu0 0.0
  %1069 = vmatpush2.msra.mxu0 0.0
  %1070 = vmatprep.subr.mxu0 0.0
  %1071 = vmatpush2.msra.mxu0 0.0
  %1072 = vmatprep.subr.mxu0 0.0
  %1073 = vmatpush2.msra.mxu0 0.0
  %1074 = vmatprep.subr.mxu0 0.0
  %1075 = vmatpush2.msra.mxu0 0.0
  %1076 = vmatprep.subr.mxu0 0.0
  %1077 = vmatpush2.msra.mxu0 0.0
  %1078 = vmatprep.subr.mxu0 0.0
  %1079 = vmatpush2.msra.mxu0 0.0
  %1080 = vmatprep.mubr.f32.mxu0 0.0
  %1081 = vmatmul.mubr.f32.gmra.mxu0 %v1014
  %v1082 = vpop.f32.mrf.mxu0
  %v1083 = vadd.f32 0.0, %v1082
  %v1084 = vpop.f32.mrf.mxu0
  %1085 = vdwg.mxu0
  %v1086 = vadd.f32 %v1000, %v1083
  %1087 = vrot.lane.b32.xlu0 %v481, 121
  %v1088 = vpop.permute.xlu0 %1087
  %1089 = vrot.lane.b32.xlu0 %v482, 121
  %v1090 = vpop.permute.xlu0 %1089
  %1091 = vrot.lane.b32.xlu0 %v483, 121
  %v1092 = vpop.permute.xlu0 %1091
  %1093 = vrot.lane.b32.xlu0 %v484, 121
  %v1094 = vpop.permute.xlu0 %1093
  %v1100 = vsel %vm510, %v492, 0
  %1102 = vmatprep.subr.mxu0 0.0
  %1103 = vmatpush1.msra.mxu0 0.0
  %1104 = vmatprep.subr.mxu0 0.0
  %1105 = vmatpush1.msra.mxu0 0.0
  %1106 = vmatprep.subr.mxu0 0.0
  %1107 = vmatpush1.msra.mxu0 0.0
  %1108 = vmatprep.subr.mxu0 0.0
  %1109 = vmatpush1.msra.mxu0 0.0
  %1110 = vmatprep.subr.mxu0 0.0
  %1111 = vmatpush1.msra.mxu0 0.0
  %1112 = vmatprep.subr.mxu0 0.0
  %1113 = vmatpush1.msra.mxu0 0.0
  %1114 = vmatprep.subr.mxu0 0.0
  %1115 = vmatpush1.msra.mxu0 0.0
  %1116 = vmatprep.subr.mxu0 0.0
  %1117 = vmatpush1.msra.mxu0 0.0
  %1118 = vmatprep.subr.mxu0 0.0
  %1119 = vmatpush1.msra.mxu0 0.0
  %1120 = vmatprep.subr.mxu0 0.0
  %1121 = vmatpush1.msra.mxu0 0.0
  %1122 = vmatprep.subr.mxu0 0.0
  %1123 = vmatpush1.msra.mxu0 0.0
  %1124 = vmatprep.subr.mxu0 0.0
  %1125 = vmatpush1.msra.mxu0 0.0
  %1126 = vmatprep.subr.mxu0 0.0
  %1127 = vmatpush1.msra.mxu0 %v1094
  %1128 = vmatprep.subr.mxu0 0.0
  %1129 = vmatpush1.msra.mxu0 %v1092
  %1130 = vmatprep.subr.mxu0 0.0
  %1131 = vmatpush1.msra.mxu0 %v1090
  %1132 = vmatprep.subr.mxu0 0.0
  %1133 = vmatpush1.msra.mxu0 %v1088
  %1134 = vmatprep.subr.mxu0 0.0
  %1135 = vmatpush2.msra.mxu0 0.0
  %1136 = vmatprep.subr.mxu0 0.0
  %1137 = vmatpush2.msra.mxu0 0.0
  %1138 = vmatprep.subr.mxu0 0.0
  %1139 = vmatpush2.msra.mxu0 0.0
  %1140 = vmatprep.subr.mxu0 0.0
  %1141 = vmatpush2.msra.mxu0 0.0
  %1142 = vmatprep.subr.mxu0 0.0
  %1143 = vmatpush2.msra.mxu0 0.0
  %1144 = vmatprep.subr.mxu0 0.0
  %1145 = vmatpush2.msra.mxu0 0.0
  %1146 = vmatprep.subr.mxu0 0.0
  %1147 = vmatpush2.msra.mxu0 0.0
  %1148 = vmatprep.subr.mxu0 0.0
  %1149 = vmatpush2.msra.mxu0 0.0
  %1150 = vmatprep.subr.mxu0 0.0
  %1151 = vmatpush2.msra.mxu0 0.0
  %1152 = vmatprep.subr.mxu0 0.0
  %1153 = vmatpush2.msra.mxu0 0.0
  %1154 = vmatprep.subr.mxu0 0.0
  %1155 = vmatpush2.msra.mxu0 0.0
  %1156 = vmatprep.subr.mxu0 0.0
  %1157 = vmatpush2.msra.mxu0 0.0
  %1158 = vmatprep.subr.mxu0 0.0
  %1159 = vmatpush2.msra.mxu0 0.0
  %1160 = vmatprep.subr.mxu0 0.0
  %1161 = vmatpush2.msra.mxu0 0.0
  %1162 = vmatprep.subr.mxu0 0.0
  %1163 = vmatpush2.msra.mxu0 0.0
  %1164 = vmatprep.subr.mxu0 0.0
  %1165 = vmatpush2.msra.mxu0 0.0
  %1166 = vmatprep.mubr.f32.mxu0 0.0
  %1167 = vmatmul.mubr.f32.gmra.mxu0 %v1100
  %v1168 = vpop.f32.mrf.mxu0
  %v1169 = vadd.f32 0.0, %v1168
  %v1170 = vpop.f32.mrf.mxu0
  %1171 = vdwg.mxu0
  %v1172 = vadd.f32 %v1086, %v1169
  %1173 = vrot.lane.b32.xlu0 %v481, 120
  %v1174 = vpop.permute.xlu0 %1173
  %1175 = vrot.lane.b32.xlu0 %v482, 120
  %v1176 = vpop.permute.xlu0 %1175
  %1177 = vrot.lane.b32.xlu0 %v483, 120
  %v1178 = vpop.permute.xlu0 %1177
  %1179 = vrot.lane.b32.xlu0 %v484, 120
  %v1180 = vpop.permute.xlu0 %1179
  %v1186 = vsel %vm510, %v493, 0
  %1188 = vmatprep.subr.mxu0 0.0
  %1189 = vmatpush1.msra.mxu0 0.0
  %1190 = vmatprep.subr.mxu0 0.0
  %1191 = vmatpush1.msra.mxu0 0.0
  %1192 = vmatprep.subr.mxu0 0.0
  %1193 = vmatpush1.msra.mxu0 0.0
  %1194 = vmatprep.subr.mxu0 0.0
  %1195 = vmatpush1.msra.mxu0 0.0
  %1196 = vmatprep.subr.mxu0 0.0
  %1197 = vmatpush1.msra.mxu0 0.0
  %1198 = vmatprep.subr.mxu0 0.0
  %1199 = vmatpush1.msra.mxu0 0.0
  %1200 = vmatprep.subr.mxu0 0.0
  %1201 = vmatpush1.msra.mxu0 0.0
  %1202 = vmatprep.subr.mxu0 0.0
  %1203 = vmatpush1.msra.mxu0 0.0
  %1204 = vmatprep.subr.mxu0 0.0
  %1205 = vmatpush1.msra.mxu0 0.0
  %1206 = vmatprep.subr.mxu0 0.0
  %1207 = vmatpush1.msra.mxu0 0.0
  %1208 = vmatprep.subr.mxu0 0.0
  %1209 = vmatpush1.msra.mxu0 0.0
  %1210 = vmatprep.subr.mxu0 0.0
  %1211 = vmatpush1.msra.mxu0 0.0
  %1212 = vmatprep.subr.mxu0 0.0
  %1213 = vmatpush1.msra.mxu0 %v1180
  %1214 = vmatprep.subr.mxu0 0.0
  %1215 = vmatpush1.msra.mxu0 %v1178
  %1216 = vmatprep.subr.mxu0 0.0
  %1217 = vmatpush1.msra.mxu0 %v1176
  %1218 = vmatprep.subr.mxu0 0.0
  %1219 = vmatpush1.msra.mxu0 %v1174
  %1220 = vmatprep.subr.mxu0 0.0
  %1221 = vmatpush2.msra.mxu0 0.0
  %1222 = vmatprep.subr.mxu0 0.0
  %1223 = vmatpush2.msra.mxu0 0.0
  %1224 = vmatprep.subr.mxu0 0.0
  %1225 = vmatpush2.msra.mxu0 0.0
  %1226 = vmatprep.subr.mxu0 0.0
  %1227 = vmatpush2.msra.mxu0 0.0
  %1228 = vmatprep.subr.mxu0 0.0
  %1229 = vmatpush2.msra.mxu0 0.0
  %1230 = vmatprep.subr.mxu0 0.0
  %1231 = vmatpush2.msra.mxu0 0.0
  %1232 = vmatprep.subr.mxu0 0.0
  %1233 = vmatpush2.msra.mxu0 0.0
  %1234 = vmatprep.subr.mxu0 0.0
  %1235 = vmatpush2.msra.mxu0 0.0
  %1236 = vmatprep.subr.mxu0 0.0
  %1237 = vmatpush2.msra.mxu0 0.0
  %1238 = vmatprep.subr.mxu0 0.0
  %1239 = vmatpush2.msra.mxu0 0.0
  %1240 = vmatprep.subr.mxu0 0.0
  %1241 = vmatpush2.msra.mxu0 0.0
  %1242 = vmatprep.subr.mxu0 0.0
  %1243 = vmatpush2.msra.mxu0 0.0
  %1244 = vmatprep.subr.mxu0 0.0
  %1245 = vmatpush2.msra.mxu0 0.0
  %1246 = vmatprep.subr.mxu0 0.0
  %1247 = vmatpush2.msra.mxu0 0.0
  %1248 = vmatprep.subr.mxu0 0.0
  %1249 = vmatpush2.msra.mxu0 0.0
  %1250 = vmatprep.subr.mxu0 0.0
  %1251 = vmatpush2.msra.mxu0 0.0
  %1252 = vmatprep.mubr.f32.mxu0 0.0
  %1253 = vmatmul.mubr.f32.gmra.mxu0 %v1186
  %v1254 = vpop.f32.mrf.mxu0
  %v1255 = vadd.f32 0.0, %v1254
  %v1256 = vpop.f32.mrf.mxu0
  %1257 = vdwg.mxu0
  %v1258 = vadd.f32 %v1172, %v1255
  %1260 = vset.pattern.permute.xlu0 2
  %1261 = vperm.xlu0 %1260, %v17
  %v1262 = vpop.permute.xlu0 %1261
  %v1264 = vadd.f32 %v1258, %v1262
  %1265 = vst.msk [vmem:[%s4] sm:$0xff] %vm195, %v1264
  // Predicated region
  $region18: #{cnn_decoder_forward.1} parent=0 // pred_check
    _
  $region19: #{cnn_decoder_forward.1} parent=0 // pred_check_branch
    %1267 = sbr.rel (0) target = $region21
  $region20: #{cnn_decoder_forward.1} parent=0 // pred_region
    _
  $region21: #{cnn_decoder_forward.1} parent=0 // pred_fallthru
    _
  // Predicated region
  $region22: #{cnn_decoder_forward.1} parent=0 // pred_check
    _
  $region23: #{cnn_decoder_forward.1} parent=0 // pred_check_branch
    %1269 = sbr.rel (0) target = $region25
  $region24: #{cnn_decoder_forward.1} parent=0 // pred_region
    _
  $region25: #{cnn_decoder_forward.1} parent=0 // pred_fallthru
    _

</llo_original>
